<compile_context>
chip_gen: v7x
topology: tpu7x:2x2x1
jax: 0.10.0
libtpu: 0.0.40
codegen_flags: <defaults>
</compile_context>

<pallas_src>
import jax
import jax.numpy as jnp
from jax.experimental import pallas as pl
from jax.experimental.pallas import tpu as pltpu

LANE = 128
SUBLANE = 8


def _round_up(n, m):
    return ((n + m - 1) // m) * m


def _cdiv(a, b):
    return -(-a // b)


def _defect_kernel(x_ref, o_ref):
    """Running elementwise max of raw objectness logits.

    x_ref: (B, TR, 128) tile of the concatenated logit slab (native dtype).
    o_ref: (B, 8, 128) per-split running max.  Its block index is constant
           along the reduction grid axis, so it stays resident in VMEM and
           acts as the accumulator (P3 pattern).
    """
    k = pl.program_id(1)

    @pl.when(k == 0)
    def _():
        o_ref[...] = jnp.full(o_ref.shape, -jnp.inf, dtype=o_ref.dtype)

    tr = x_ref.shape[1]
    n_groups = tr // SUBLANE
    # Pairwise elementwise-max tree over 8-row groups of the tile:
    # pure vld + VPU vmax, no cross-lane/XLU reduce, no wide scratch stores.
    chunks = [x_ref[:, g * SUBLANE:(g + 1) * SUBLANE, :] for g in range(n_groups)]
    while len(chunks) > 1:
        nxt = [jnp.maximum(chunks[2 * i], chunks[2 * i + 1])
               for i in range(len(chunks) // 2)]
        if len(chunks) % 2:
            nxt.append(chunks[-1])
        chunks = nxt
    o_ref[...] = jnp.maximum(o_ref[...], chunks[0])


def _reference(out0, out1, out2):
    """Pure-JAX reference mirroring the PyTorch forward."""
    def head_p(o):
        obj = jax.nn.sigmoid(o[..., 4].astype(jnp.float32))
        return jnp.max(obj.reshape(obj.shape[0], -1), axis=1, keepdims=True)

    p0, p1, p2 = head_p(out0), head_p(out1), head_p(out2)
    return jnp.max(jnp.concatenate([p0, p1, p2], axis=1), axis=1, keepdims=True)


def simple_defect_classifier(out0, out1, out2, *,
                             target_tile_bytes=2 << 20,
                             force_kernel=False,
                             small_n_threshold=1 << 18):
    """YOLO-style objectness max across three heads -> (B, 1) probability."""
    b = out0.shape[0]

    # XLA glue: slice objectness channel + flatten, keep NATIVE dtype, concat.
    # TODO(synk): for very small C, fold the channel-4 extraction into the
    # kernel with an iota lane-mask to avoid materializing this slab in HBM.
    slabs = [o[..., 4].reshape(b, -1) for o in (out0, out1, out2)]
    x = jnp.concatenate(slabs, axis=1)
    n = x.shape[1]

    if (not force_kernel) and b * n <= small_n_threshold:
        # pallas_call fixed overhead dominates for tiny slabs.
        return _reference(out0, out1, out2)

    itemsize = jnp.dtype(x.dtype).itemsize
    rows = _cdiv(n, LANE)

    # Split the stream across two TensorCores (v7x megacore) for large inputs.
    nsplit = 2 if rows >= 4096 else 1
    rows_per_split = _cdiv(rows, nsplit)

    # Sublane-dense tiles, big enough (~target_tile_bytes per grid step) to
    # amortize per-step overhead, capped to bound the unrolled max-tree size.
    tr = max(SUBLANE,
             (target_tile_bytes // (b * LANE * itemsize)) // SUBLANE * SUBLANE)
    tr = min(tr, 4096)
    tr = min(tr, _round_up(rows_per_split, SUBLANE))

    nsteps = _cdiv(rows_per_split, tr)
    rpad = nsplit * nsteps * tr
    npad = rpad * LANE
    if npad != n:
        # -inf padding can never win the max (sigmoid applied after reduce).
        x = jnp.pad(x, ((0, 0), (0, npad - n)), constant_values=float("-inf"))
    x3 = x.reshape(b, rpad, LANE)

    tile_bytes = b * tr * LANE * itemsize
    # 2x double-buffered input tile + small output block + headroom; keep it
    # under the v7x 64 MiB per-TC ceiling, above the v5e 16 MiB default.
    vmem_limit = int(min(64 << 20, max(32 << 20, 4 * tile_bytes + (4 << 20))))

    raw = pl.pallas_call(
        _defect_kernel,
        out_shape=jax.ShapeDtypeStruct((b, nsplit * SUBLANE, LANE), x.dtype),
        grid_spec=pltpu.PrefetchScalarGridSpec(
            num_scalar_prefetch=0,
            grid=(nsplit, nsteps),
            in_specs=[pl.BlockSpec((b, tr, LANE),
                                   lambda c, k: (0, c * nsteps + k, 0))],
            out_specs=pl.BlockSpec((b, SUBLANE, LANE), lambda c, k: (0, c, 0)),
        ),
        compiler_params=pltpu.CompilerParams(
            dimension_semantics=("parallel", "arbitrary"),
            vmem_limit_bytes=vmem_limit,
        ),
    )(x3)

    # Tiny final reduce (over core splits, sublanes, lanes) + sigmoid in XLA.
    m = jnp.max(raw.astype(jnp.float32), axis=(1, 2))  # (B,)
    return jax.nn.sigmoid(m)[:, None]                  # (B, 1)


if __name__ == "__main__":
    key = jax.random.PRNGKey(0)
    k0, k1, k2 = jax.random.split(key, 3)
    B, A, C = 2, 3, 8  # C >= 5 so channel 4 (objectness) exists
    out0 = jax.random.normal(k0, (B, A, 16, 16, C), dtype=jnp.float32)
    out1 = jax.random.normal(k1, (B, A, 8, 8, C), dtype=jnp.float32)
    out2 = jax.random.normal(k2, (B, A, 4, 4, C), dtype=jnp.float32)

    # force_kernel=True so the small test shapes exercise the Pallas path.
    result = jax.block_until_ready(
        simple_defect_classifier(out0, out1, out2, force_kernel=True))
    expected = jax.block_until_ready(_reference(out0, out1, out2))

    assert result.shape == (B, 1), result.shape
    assert jnp.allclose(result, expected, atol=1e-6, rtol=1e-6), (result, expected)

    print("KERNEL_OK")
</pallas_src>

<mosaic_0001>
module attributes {stable_mosaic.version = 11 : i64} {
  func.func @_defect_kernel(%arg0: i32, %arg1: i32, %arg2: memref<2x8x128xf32, #tpu.memory_space<vmem>>, %arg3: memref<2x8x128xf32, #tpu.memory_space<vmem>>) attributes {dimension_semantics = [#tpu.dimension_semantics<parallel>, #tpu.dimension_semantics<arbitrary>], iteration_bounds = array<i64: 1, 1>, scalar_prefetch = 0 : i64, scratch_operands = 0 : i64, tpu.core_type = #tpu.core_type<tc>, window_params = [{transform_indices = @transform_0, window_bounds = array<i64: 2, 8, 128>}, {transform_indices = @transform_1, window_bounds = array<i64: 2, 8, 128>}]} {
    %c0_i32 = arith.constant 0 : i32
    %0 = arith.cmpi eq, %arg1, %c0_i32 : i32
    %1 = arith.extui %0 : i1 to i32
    %c0_i32_0 = arith.constant 0 : i32
    %2 = arith.cmpi ne, %1, %c0_i32_0 : i32
    scf.if %2 {
      %cst = arith.constant 0xFF800000 : f32
      %7 = vector.broadcast %cst : f32 to vector<2x8x128xf32>
      %c0_9 = arith.constant 0 : index
      %c0_10 = arith.constant 0 : index
      %c0_11 = arith.constant 0 : index
      %8 = vector.load %arg3[%c0_9, %c0_10, %c0_11] : memref<2x8x128xf32, #tpu.memory_space<vmem>>, vector<2x8x128xf32>
      tpu.vector_store %arg3[%c0_9, %c0_10, %c0_11], %7 {strides = array<i32>} : memref<2x8x128xf32, #tpu.memory_space<vmem>>, vector<2x8x128xf32>,
    } else {
    }
    %c0 = arith.constant 0 : index
    %c0_1 = arith.constant 0 : index
    %c0_2 = arith.constant 0 : index
    %3 = vector.load %arg2[%c0, %c0_1, %c0_2] : memref<2x8x128xf32, #tpu.memory_space<vmem>>, vector<2x8x128xf32>
    %c0_3 = arith.constant 0 : index
    %c0_4 = arith.constant 0 : index
    %c0_5 = arith.constant 0 : index
    %4 = vector.load %arg3[%c0_3, %c0_4, %c0_5] : memref<2x8x128xf32, #tpu.memory_space<vmem>>, vector<2x8x128xf32>
    %5 = arith.maximumf %4, %3 : vector<2x8x128xf32>
    %c0_6 = arith.constant 0 : index
    %c0_7 = arith.constant 0 : index
    %c0_8 = arith.constant 0 : index
    %6 = vector.load %arg3[%c0_6, %c0_7, %c0_8] : memref<2x8x128xf32, #tpu.memory_space<vmem>>, vector<2x8x128xf32>
    tpu.vector_store %arg3[%c0_6, %c0_7, %c0_8], %5 {strides = array<i32>} : memref<2x8x128xf32, #tpu.memory_space<vmem>>, vector<2x8x128xf32>,
    return
  }
  func.func @transform_0(%arg0: i32, %arg1: i32) -> (i32, i32, i32) {
    %c1_i32 = arith.constant 1 : i32
    %0 = arith.muli %arg0, %c1_i32 : i32
    %1 = arith.addi %0, %arg1 : i32
    %c0_i32 = arith.constant 0 : i32
    %c0_i32_0 = arith.constant 0 : i32
    %c0_i32_1 = arith.constant 0 : i32
    return %c0_i32, %1, %c0_i32_0 : i32, i32, i32
  }
  func.func @transform_1(%arg0: i32, %arg1: i32) -> (i32, i32, i32) {
    %c0_i32 = arith.constant 0 : i32
    %c0_i32_0 = arith.constant 0 : i32
    %c0_i32_1 = arith.constant 0 : i32
    return %c0_i32, %arg0, %c0_i32_0 : i32, i32, i32
  }
}

</mosaic_0001>

<llo_original>
// kernel: tpu_custom_call.1
$region0: #{tpu_custom_call.1}
  #allocation0 [shape = 'u32[]', space=smem, size = 0x4, offset = 0x4, fixed_abs, tag = 'smem constant byte address 0x4 - core index']
  #allocation1 [shape = 'u32[144,128]{1,0:T(1,128)}', space=vmem, size = 0x12000, scoped, tag = 'internal scratch']
  %s0 = inlined_call_operand.hbm [shape: f32[2,8,128], index: 0, kind: input, shape index: {}]
  %s1 = inlined_call_operand.hbm [shape: f32[2,8,128], index: 1, kind: output, shape index: {}]
  %s2 = sld [smem:[#allocation0]]
  $region22: #{tpu_custom_call.1} parent=0
    _
  %s4 = ssub.s32 1, %s2
  %s5 = scalar_select 0, %s4, %s2
  $region1: #{tpu_custom_call.1} parent=0
    #allocation2 [shape = 'u8[8192]{0}', space=vmem, size = 0x2000, scoped, tag = 'input window, operand 0, single buffered']
    #allocation3 [shape = 's32[1]{0}', space=sflag, size = 0x4, scoped, tag = 'scoped memory for tpu_custom_call.1']
    #allocation4 [shape = 's32[1]{0}', space=sflag, size = 0x4, scoped, tag = 'scoped memory for tpu_custom_call.1']
    #allocation5 [shape = 'u8[8192]{0}', space=vmem, size = 0x2000, scoped, tag = 'output window, operand 0, single buffered']
    %6 = vsyncpa [#allocation3], 0
    %7 = vsyncpa [#allocation4], 0
    // Predicated region
    $region2: #{tpu_custom_call.1} parent=1 // pred_check
      _
    $region3: #{tpu_custom_call.1} parent=1 // pred_check_branch
      %9 = sbr.rel (0) target = $region5
    $region4: #{tpu_custom_call.1} parent=1 // pred_region
      %s10 = sadd.s32 0, 0
      %s12 = ssub.s32 256, 256
      %13 = vsyncadd [#allocation3], %s12
      %s14 = smul.addr %s10, 128
      %s15 = scalar_lea.hbm %s0, %s14
      %s16 = sshll.u32 [#allocation2], 4
      %s17 = int_to_ptr.vmem [resolvable:$true] %s16
      %22 = dma.hbm_to_vmem [thread:$0]  %s15, 256, %s17, [#allocation3], 128, 128, 8
    $region5: #{tpu_custom_call.1} parent=1 // pred_fallthru
      _
    // Predicated region
    $region6: #{tpu_custom_call.1} parent=1 // pred_check
      _
    $region7: #{tpu_custom_call.1} parent=1 // pred_check_branch
      %24 = sbr.rel (0) target = $region9
    $region8: #{tpu_custom_call.1} parent=1 // pred_region
      %25 = dma.done [#allocation3], 256
    $region9: #{tpu_custom_call.1} parent=1 // pred_fallthru
      _
    %s26 = sadd.s32 0, 0
    %p27 = scmp.eq.s32.totalorder 0, 0
    // Predicated region
    $region10: #{tpu_custom_call.1} parent=1 // pred_check
      %p28 = pneg %p27
    $region11: #{tpu_custom_call.1} parent=1 // pred_check_branch
      %30 = sbr.rel (%p28) target = $region13
    $region12: #{tpu_custom_call.1} parent=1 // pred_region
      %31 = vst [vmem:[#allocation5] sm:$0xff] -inf
      %32 = vst [vmem:[#allocation5 + $0x8] sm:$0xff] -inf
    $region13: #{tpu_custom_call.1} parent=1 // pred_fallthru
      _
    %v33 = vld [vmem:[#allocation2] sm:$0xff]
    %v34 = vld [vmem:[#allocation2 + $0x8] sm:$0xff]
    %v35 = vld [vmem:[#allocation5] sm:$0xff]
    %v36 = vld [vmem:[#allocation5 + $0x8] sm:$0xff]
    %v37 = vmax.f32 %v35, %v33
    %v38 = vmax.f32 %v36, %v34
    %39 = vst [vmem:[#allocation5] sm:$0xff] %v37
    %40 = vst [vmem:[#allocation5 + $0x8] sm:$0xff] %v38
    // Predicated region
    $region14: #{tpu_custom_call.1} parent=1 // pred_check
      _
    $region15: #{tpu_custom_call.1} parent=1 // pred_check_branch
      %42 = sbr.rel (0) target = $region17
    $region16: #{tpu_custom_call.1} parent=1 // pred_region
      %s44 = ssub.s32 256, 256
      %45 = vsyncadd [#allocation4], %s44
      %s46 = sshll.u32 [#allocation5], 4
      %s47 = int_to_ptr.vmem [resolvable:$true] %s46
      %52 = dma.vmem_to_hbm [thread:$0]  %s47, 256, %s1, [#allocation4], 128, 128, 8
    $region17: #{tpu_custom_call.1} parent=1 // pred_fallthru
      _
    // Predicated region
    $region18: #{tpu_custom_call.1} parent=1 // pred_check
      _
    $region19: #{tpu_custom_call.1} parent=1 // pred_check_branch
      %54 = sbr.rel (0) target = $region21
    $region20: #{tpu_custom_call.1} parent=1 // pred_region
      %55 = dma.done [#allocation4], 256
    $region21: #{tpu_custom_call.1} parent=1 // pred_fallthru
      _
    %56 = vsyncpa [#allocation3], 1
    %57 = vsyncpa [#allocation4], 1

</llo_original>
